<compile_context>
chip_gen: v7x
topology: tpu7x:2x2x1
jax: 0.10.0
libtpu: 0.0.40
codegen_flags: <defaults>
</compile_context>

<pallas_src>
import functools

import jax
import jax.numpy as jnp
from jax.experimental import pallas as pl
from jax.experimental.pallas import tpu as pltpu


def _sum_kernel(x_ref, sum_ref, *, hw, need_mask):
    # x_ref: (R, T) tile.  sum_ref: (R, 1) f32 accumulator, resident across the
    # HW-tile (last, "arbitrary") grid axis.
    @pl.when(pl.program_id(1) == 0)
    def _():
        sum_ref[...] = jnp.zeros_like(sum_ref)

    xt = x_ref[...].astype(jnp.float32)
    if need_mask:
        tile = x_ref.shape[-1]
        lane = jax.lax.broadcasted_iota(jnp.int32, xt.shape, dimension=1)
        valid = (pl.program_id(1) * tile + lane) < hw
        xt = jnp.where(valid, xt, 0.0)
    sum_ref[...] += jnp.sum(xt, axis=-1, keepdims=True)


def _scale_kernel(x_ref, s_ref, o_ref):
    # Fused broadcast multiply; s kept in f32, cast only on the final store.
    o_ref[...] = (x_ref[...] * s_ref[...]).astype(o_ref.dtype)


def _pick_tiles(rows, hw, itemsize, max_hw_tile=None):
    """Row (sublane) and HW (lane) tile sizes under a ~2 MiB per-block budget.

    The 2 MiB block keeps 2x-in + 2x-out double-buffered blocks under ~8 MiB,
    inside every generation's scoped-VMEM default (v5e 16 / v6e 32 / v7x 32 MiB)
    while the lane tile is already >=1024 for row tiles <=512 (~86% roofline).
    """
    budget_bytes = 2 * 1024 * 1024
    # Row tile: full extent when small (always a legal block shape), else a
    # 512-row block (multiple of 8); a partial last row-block is fine (stores
    # of out-of-range rows are masked by Pallas).
    r = rows if rows <= 1024 else 512
    # HW tile: multiple of 128 within budget, or the full extent if it fits.
    t = max(128, (budget_bytes // max(r * itemsize, 1)) // 128 * 128)
    if max_hw_tile is not None:
        t = min(t, max(128, max_hw_tile // 128 * 128))
    if t >= hw:
        t = hw
    return r, t


def local_attention(x, conv_w, max_hw_tile=None):
    """x: (B, C, H, W).  conv_w: (3,) Conv1d(k=3, pad=1, no bias) taps."""
    B, C, H, W = x.shape
    HW = H * W
    rows = B * C
    itemsize = jnp.dtype(x.dtype).itemsize

    R, T = _pick_tiles(rows, HW, itemsize, max_hw_tile)
    n_r = -(-rows // R)
    n_t = -(-HW // T)

    # No pad, no copy: (B, C, H, W) -> (B*C, H*W) is a contiguous reshape.
    x2 = x.reshape(rows, HW)
    xbytes = rows * HW * itemsize

    # ---- Pass 1: per-(b,c) spatial sums, f32 accumulation, tail lanes masked.
    sums = pl.pallas_call(
        functools.partial(_sum_kernel, hw=HW, need_mask=(HW % T != 0)),
        out_shape=jax.ShapeDtypeStruct((rows, 1), jnp.float32),
        grid=(n_r, n_t),
        in_specs=[pl.BlockSpec((R, T), lambda r, t: (r, t))],
        out_specs=pl.BlockSpec((R, 1), lambda r, t: (r, 0)),
        compiler_params=pltpu.CompilerParams(
            dimension_semantics=("parallel", "arbitrary"),
        ),
        cost_estimate=pl.CostEstimate(
            flops=rows * HW, transcendentals=0,
            bytes_accessed=xbytes + rows * 4),
    )(x2)

    # ---- Tiny (B, C) glue: mean -> 3-tap conv (shifted adds) -> sigmoid (f32).
    cw = conv_w.astype(jnp.float32)
    mean = sums.reshape(B, C) * jnp.float32(1.0 / HW)
    yp = jnp.pad(mean, ((0, 0), (1, 1)))          # zero channel pad == Conv1d pad=1
    yc = (cw[0] * yp[:, 0:C]
          + cw[1] * yp[:, 1:C + 1]
          + cw[2] * yp[:, 2:C + 2])
    s = jax.nn.sigmoid(yc).reshape(rows, 1)       # f32 scale per (b, c)

    # ---- Pass 2: broadcast multiply, fully parallel grid, unpadded output
    # (partial tail-block stores are masked by Pallas).
    out2 = pl.pallas_call(
        _scale_kernel,
        out_shape=jax.ShapeDtypeStruct((rows, HW), x.dtype),
        grid=(n_r, n_t),
        in_specs=[
            pl.BlockSpec((R, T), lambda r, t: (r, t)),
            pl.BlockSpec((R, 1), lambda r, t: (r, 0)),
        ],
        out_specs=pl.BlockSpec((R, T), lambda r, t: (r, t)),
        compiler_params=pltpu.CompilerParams(
            dimension_semantics=("parallel", "parallel"),
        ),
        cost_estimate=pl.CostEstimate(
            flops=rows * HW, transcendentals=0,
            bytes_accessed=2 * xbytes + rows * 4),
    )(x2, s)

    return out2.reshape(B, C, H, W)


def local_attention_ref(x, conv_w):
    """Pure-JAX reference mirroring the PyTorch module."""
    B, C, H, W = x.shape
    y = jnp.mean(x, axis=(2, 3))                          # (B, C)
    yp = jnp.pad(y, ((0, 0), (1, 1)))                     # pad channels by 1
    yc = (conv_w[0] * yp[:, 0:C]
          + conv_w[1] * yp[:, 1:C + 1]
          + conv_w[2] * yp[:, 2:C + 2])                   # (B, C)
    s = jax.nn.sigmoid(yc)
    return x * s[:, :, None, None]


if __name__ == "__main__":
    key = jax.random.PRNGKey(0)
    kx, kw, kx2 = jax.random.split(key, 3)

    # Conv1d(1, 1, kernel_size=3, bias=False): weight (1,1,3) flattened to (3,).
    bound = 1.0 / jnp.sqrt(3.0)
    conv_w = jax.random.uniform(kw, (3,), minval=-bound, maxval=bound,
                                dtype=jnp.float32)

    # Main small shape (HW == one full lane tile, no masking needed).
    B, C, H, W = 2, 4, 16, 16
    x = jax.random.normal(kx, (B, C, H, W), dtype=jnp.float32)
    out = jax.block_until_ready(local_attention(x, conv_w))
    ref = local_attention_ref(x, conv_w)
    assert out.shape == (B, C, H, W)
    assert jnp.allclose(out, ref, atol=1e-5, rtol=1e-5), "mismatch vs reference"

    # Exercise the unpadded-tail path: HW=160 with a forced 128-lane tile ->
    # masked last tile in pass 1 and masked partial-block stores in pass 2.
    xt = jax.random.normal(kx2, (2, 4, 16, 10), dtype=jnp.float32)
    outt = jax.block_until_ready(local_attention(xt, conv_w, max_hw_tile=128))
    reft = local_attention_ref(xt, conv_w)
    assert jnp.allclose(outt, reft, atol=1e-5, rtol=1e-5), "tail-path mismatch"

    print("KERNEL_OK")
</pallas_src>

<mosaic_0001>
module attributes {stable_mosaic.version = 11 : i64} {
  func.func @_sum_kernel(%arg0: i32, %arg1: i32, %arg2: memref<8x256xf32, #tpu.memory_space<vmem>>, %arg3: memref<8x1xf32, #tpu.memory_space<vmem>>) attributes {dimension_semantics = [#tpu.dimension_semantics<parallel>, #tpu.dimension_semantics<arbitrary>], iteration_bounds = array<i64: 1, 1>, scalar_prefetch = 0 : i64, scratch_operands = 0 : i64, tpu.core_type = #tpu.core_type<tc>, window_params = [{transform_indices = @transform_0, window_bounds = array<i64: 8, 256>}, {transform_indices = @transform_1, window_bounds = array<i64: 8, 1>}]} {
    %c0_i32 = arith.constant 0 : i32
    %0 = arith.cmpi eq, %arg1, %c0_i32 : i32
    %1 = arith.extui %0 : i1 to i32
    %c0_i32_0 = arith.constant 0 : i32
    %2 = arith.cmpi ne, %1, %c0_i32_0 : i32
    scf.if %2 {
      %cst_6 = arith.constant 0.000000e+00 : f32
      %9 = vector.broadcast %cst_6 : f32 to vector<8x1xf32>
      %c0_7 = arith.constant 0 : index
      %c0_8 = arith.constant 0 : index
      %10 = vector.load %arg3[%c0_7, %c0_8] : memref<8x1xf32, #tpu.memory_space<vmem>>, vector<8x1xf32>
      tpu.vector_store %arg3[%c0_7, %c0_8], %9 {strides = array<i32>} : memref<8x1xf32, #tpu.memory_space<vmem>>, vector<8x1xf32>,
    } else {
    }
    %c0 = arith.constant 0 : index
    %c0_1 = arith.constant 0 : index
    %3 = vector.load %arg2[%c0, %c0_1] : memref<8x256xf32, #tpu.memory_space<vmem>>, vector<8x256xf32>
    %c0_2 = arith.constant 0 : index
    %c0_3 = arith.constant 0 : index
    %4 = vector.load %arg3[%c0_2, %c0_3] : memref<8x1xf32, #tpu.memory_space<vmem>>, vector<8x1xf32>
    %cst = arith.constant dense<0.000000e+00> : vector<8xf32>
    %5 = vector.multi_reduction <add>, %3, %cst [1] : vector<8x256xf32> to vector<8xf32>
    %6 = vector.shape_cast %5 : vector<8xf32> to vector<8x1xf32>
    %7 = arith.addf %4, %6 : vector<8x1xf32>
    %c0_4 = arith.constant 0 : index
    %c0_5 = arith.constant 0 : index
    %8 = vector.load %arg3[%c0_4, %c0_5] : memref<8x1xf32, #tpu.memory_space<vmem>>, vector<8x1xf32>
    tpu.vector_store %arg3[%c0_4, %c0_5], %7 {strides = array<i32>} : memref<8x1xf32, #tpu.memory_space<vmem>>, vector<8x1xf32>,
    return
  }
  func.func @transform_0(%arg0: i32, %arg1: i32) -> (i32, i32) {
    %c0_i32 = arith.constant 0 : i32
    return %arg0, %arg1 : i32, i32
  }
  func.func @transform_1(%arg0: i32, %arg1: i32) -> (i32, i32) {
    %c0_i32 = arith.constant 0 : i32
    %c0_i32_0 = arith.constant 0 : i32
    return %arg0, %c0_i32 : i32, i32
  }
}

</mosaic_0001>

<llo_original>
// kernel: tpu_custom_call.1
$region0: #{tpu_custom_call.1}
  #allocation0 [shape = 'u32[]', space=smem, size = 0x4, offset = 0x4, fixed_abs, tag = 'smem constant byte address 0x4 - core index']
  #allocation1 [shape = 'u32[144,128]{1,0:T(1,128)}', space=vmem, size = 0x12000, scoped, tag = 'internal scratch']
  %s0 = inlined_call_operand.hbm [shape: f32[8,256], index: 0, kind: input, shape index: {}]
  %s1 = inlined_call_operand.vmem [shape: f32[8,1], index: 1, kind: output, shape index: {}]
  %s2 = sld [smem:[#allocation0]]
  $region22: #{tpu_custom_call.1} parent=0
    _
  %s4 = ssub.s32 1, %s2
  %s5 = scalar_select 0, %s4, %s2
  $region1: #{tpu_custom_call.1} parent=0
    #allocation2 [shape = 'u8[8192]{0}', space=vmem, size = 0x2000, scoped, tag = 'input window, operand 0, single buffered']
    #allocation3 [shape = 's32[1]{0}', space=sflag, size = 0x4, scoped, tag = 'scoped memory for tpu_custom_call.1']
    %6 = vsyncpa [#allocation3], 0
    // Predicated region
    $region2: #{tpu_custom_call.1} parent=1 // pred_check
      _
    $region3: #{tpu_custom_call.1} parent=1 // pred_check_branch
      %8 = sbr.rel (0) target = $region5
    $region4: #{tpu_custom_call.1} parent=1 // pred_region
      %s10 = ssub.s32 256, 256
      %11 = vsyncadd [#allocation3], %s10
      %s13 = sshll.u32 [#allocation2], 4
      %s14 = int_to_ptr.vmem [resolvable:$true] %s13
      %16 = dma.hbm_to_vmem [thread:$0]  %s0, 256, %s14, [#allocation3]
    $region5: #{tpu_custom_call.1} parent=1 // pred_fallthru
      _
    // Predicated region
    $region6: #{tpu_custom_call.1} parent=1 // pred_check
      _
    $region7: #{tpu_custom_call.1} parent=1 // pred_check_branch
      %18 = sbr.rel (0) target = $region9
    $region8: #{tpu_custom_call.1} parent=1 // pred_region
      %19 = dma.done [#allocation3], 256
    $region9: #{tpu_custom_call.1} parent=1 // pred_fallthru
      _
    %p20 = scmp.eq.s32.totalorder 0, 0
    // Predicated region
    $region10: #{tpu_custom_call.1} parent=1 // pred_check
      %p21 = pneg %p20
    $region11: #{tpu_custom_call.1} parent=1 // pred_check_branch
      %23 = sbr.rel (%p21) target = $region13
    $region12: #{tpu_custom_call.1} parent=1 // pred_region
      %vm24 = vcmask 7168
      %25 = vst.msk [vmem:[%s1] sm:$0xff] %vm24, 0.0
    $region13: #{tpu_custom_call.1} parent=1 // pred_fallthru
      _
    %v26 = vld [vmem:[#allocation2] sm:$0xff]
    %v27 = vld [vmem:[#allocation2 + $0x8] sm:$0xff]
    %v28 = vld [vmem:[%s1] sm:$0xff]
    %v29 = vadd.f32 %v26, %v27
    %30 = vadd.xlane.f32.xlu0 %v29
    %v31 = vpop.xlane.xlu0 %30
    %v32 = vadd.f32 %v28, %v31
    %vm33 = vcmask 7168
    %34 = vst.msk [vmem:[%s1] sm:$0xff] %vm33, %v32
    // Predicated region
    $region14: #{tpu_custom_call.1} parent=1 // pred_check
      _
    $region15: #{tpu_custom_call.1} parent=1 // pred_check_branch
      %36 = sbr.rel (0) target = $region17
    $region16: #{tpu_custom_call.1} parent=1 // pred_region
      _
    $region17: #{tpu_custom_call.1} parent=1 // pred_fallthru
      _
    // Predicated region
    $region18: #{tpu_custom_call.1} parent=1 // pred_check
      _
    $region19: #{tpu_custom_call.1} parent=1 // pred_check_branch
      %38 = sbr.rel (0) target = $region21
    $region20: #{tpu_custom_call.1} parent=1 // pred_region
      _
    $region21: #{tpu_custom_call.1} parent=1 // pred_fallthru
      _
    %39 = vsyncpa [#allocation3], 1

</llo_original>
